<compile_context>
chip_gen: v5e
topology: v5e:2x2
jax: 0.10.0
libtpu: 0.0.40
codegen_flags: <defaults>
</compile_context>

<pallas_src>
import functools

import jax
import jax.numpy as jnp
import numpy as np
from jax.experimental import pallas as pl
from jax.experimental.pallas import tpu as pltpu


# ----------------------------- fused kernel --------------------------------------

def _pool3x3s2(pad_ref, ho, wo):
    """3x3 / stride-2 max pool over a zero-padded channels-last VMEM scratch.

    pad_ref: (2*ho + 2, 2*wo + 2, C), already SAME-padded with zeros; the trailing
    extra row/column is dead data that is never selected.  Returns (ho, wo, C).
    """
    # W direction: the three window taps via sublane-strided loads (stride 2).
    t0 = pad_ref[:, pl.ds(0, wo, stride=2), :]
    t1 = pad_ref[:, pl.ds(1, wo, stride=2), :]
    t2 = pad_ref[:, pl.ds(2, wo, stride=2), :]
    pw = jnp.maximum(jnp.maximum(t0, t1), t2)              # (2*ho + 2, wo, C)
    # H direction: even/odd split via a pure major-dim reshape (minor dims untouched).
    t = pw.reshape(ho + 1, 2, wo, pw.shape[-1])
    even, odd = t[:, 0], t[:, 1]
    return jnp.maximum(jnp.maximum(even[:ho], odd[:ho]), even[1:])   # (ho, wo, C)


def _bifpn_p6p7_kernel(x_ref, w_ref, shift_ref, o6_ref, o7_ref, ypad_ref, p6pad_ref,
                       *, H, W, Ho, Wo, H7, W7, top6, left6, top7, left7):
    # ---- 1x1 conv (MXU matmul, channels-major) + folded conv-bias/BN shift --------
    # x_ref: (1, Cin, H*W)   w_ref: (Cp, Cin) with BN scale folded in   shift_ref: (1, Cp)
    y_t = jnp.dot(w_ref[...], x_ref[0], preferred_element_type=jnp.float32)  # (Cp, H*W)
    # One in-VMEM XLU transpose back to channels-last (lane-dense pooling layout).
    y = jnp.transpose(y_t) + shift_ref[...]                                   # (H*W, Cp)
    Cp = y.shape[-1]

    # ---- SAME padding entirely in VMEM (pad value 0.0, matching cvpods F.pad) -----
    # Note: cvpods' "SAME" MaxPool2d pads with zeros, so zeros (not -inf) is correct here.
    ypad_ref[...] = jnp.zeros_like(ypad_ref)
    p6pad_ref[...] = jnp.zeros_like(p6pad_ref)
    ypad_ref[top6:top6 + H, left6:left6 + W, :] = y.reshape(H, W, Cp)

    # ---- p6 = maxpool 3x3 / s2 -----------------------------------------------------
    p6 = _pool3x3s2(ypad_ref, Ho, Wo)                      # (Ho, Wo, Cp)
    o6_ref[0] = p6.astype(o6_ref.dtype)

    # ---- p7 = maxpool 3x3 / s2 on p6 (p6 never leaves VMEM) -------------------------
    p6pad_ref[top7:top7 + Ho, left7:left7 + Wo, :] = p6
    p7 = _pool3x3s2(p6pad_ref, H7, W7)                     # (H7, W7, Cp)
    o7_ref[0] = p7.astype(o7_ref.dtype)


# ----------------------------- wrapper --------------------------------------------

def _same_pool_geometry(size):
    """Output size and top/left pad for k=3, s=2, TF-'SAME' pooling."""
    out = -(-size // 2)
    pad = max((out - 1) * 2 + 3 - size, 0)
    return out, pad // 2


def bifpn_p6p7_forward(x_nchw, params):
    """x_nchw: (N, Cin, H, W) float32. Returns [p6, p7] in NCHW, like the PyTorch module."""
    N, Cin, H, W = x_nchw.shape
    w = params["w"]          # (Cin, Cout)  (torch weight (Cout,Cin,1,1) stored transposed)
    scale = params["scale"]  # (Cout,)  BN scale = gamma / sqrt(var + eps)
    shift = params["shift"]  # (Cout,)  folded conv-bias + BN shift
    Cout = w.shape[1]
    Cp = -(-Cout // 128) * 128   # pad channels to a 128-lane multiple -> unmasked stores

    # Fold the BN scale into the weight; keep only the additive shift for the kernel.
    w_scaled = w.astype(jnp.float32) * scale.astype(jnp.float32)[None, :]   # (Cin, Cout)
    wp_t = jnp.zeros((Cp, Cin), jnp.float32).at[:Cout, :].set(w_scaled.T)   # (Cp, Cin)
    shift_p = jnp.zeros((1, Cp), jnp.float32).at[0, :Cout].set(shift.astype(jnp.float32))

    # Pure reshape (no HBM transpose): each image is consumed as (Cin, H*W).
    x_flat = x_nchw.reshape(N, Cin, H * W).astype(jnp.float32)

    Ho, top6 = _same_pool_geometry(H)
    Wo, left6 = _same_pool_geometry(W)
    H7, top7 = _same_pool_geometry(Ho)
    W7, left7 = _same_pool_geometry(Wo)
    Hp6, Wp6 = 2 * Ho + 2, 2 * Wo + 2
    Hp7, Wp7 = 2 * H7 + 2, 2 * W7 + 2

    kernel = functools.partial(
        _bifpn_p6p7_kernel, H=H, W=W, Ho=Ho, Wo=Wo, H7=H7, W7=W7,
        top6=top6, left6=left6, top7=top7, left7=left7)

    p6p, p7p = pl.pallas_call(
        kernel,
        out_shape=(jax.ShapeDtypeStruct((N, Ho, Wo, Cp), jnp.float32),
                   jax.ShapeDtypeStruct((N, H7, W7, Cp), jnp.float32)),
        grid=(N,),
        in_specs=[
            pl.BlockSpec((1, Cin, H * W), lambda n: (n, 0, 0)),
            pl.BlockSpec((Cp, Cin), lambda n: (0, 0)),
            pl.BlockSpec((1, Cp), lambda n: (0, 0)),
        ],
        out_specs=(
            pl.BlockSpec((1, Ho, Wo, Cp), lambda n: (n, 0, 0, 0)),
            pl.BlockSpec((1, H7, W7, Cp), lambda n: (n, 0, 0, 0)),
        ),
        scratch_shapes=[
            pltpu.VMEM((Hp6, Wp6, Cp), jnp.float32),   # SAME-padded conv output y
            pltpu.VMEM((Hp7, Wp7, Cp), jnp.float32),   # SAME-padded p6
        ],
        compiler_params=pltpu.CompilerParams(
            dimension_semantics=("parallel",),
            vmem_limit_bytes=32 * 1024 * 1024,
        ),
    )(x_flat, wp_t, shift_p)

    # small outputs: strip channel padding and return NCHW like the PyTorch module
    p6 = jnp.transpose(p6p[..., :Cout], (0, 3, 1, 2))
    p7 = jnp.transpose(p7p[..., :Cout], (0, 3, 1, 2))
    return [p6, p7]


# ----------------------------- pure-JAX reference ----------------------------------

def _reference(x_nchw, w, b, gamma, beta, mean, var, eps=1e-5):
    x = jnp.transpose(x_nchw, (0, 2, 3, 1))
    y = jnp.einsum("nhwc,cd->nhwd", x, w,
                   precision=jax.lax.Precision.HIGHEST) + b
    y = (y - mean) / jnp.sqrt(var + eps) * gamma + beta

    def pool(z):
        N, H, W, C = z.shape
        Ho, Wo = -(-H // 2), -(-W // 2)
        ph = max((Ho - 1) * 2 + 3 - H, 0)
        pw = max((Wo - 1) * 2 + 3 - W, 0)
        zp = jnp.pad(z, ((0, 0), (ph // 2, ph - ph // 2),
                         (pw // 2, pw - pw // 2), (0, 0)))
        return jax.lax.reduce_window(zp, -jnp.inf, jax.lax.max,
                                     (1, 3, 3, 1), (1, 2, 2, 1), "VALID")

    p6 = pool(y)
    p7 = pool(p6)
    return jnp.transpose(p6, (0, 3, 1, 2)), jnp.transpose(p7, (0, 3, 1, 2))


# ----------------------------- main -------------------------------------------------

if __name__ == "__main__":
    N, Cin, Cout, H, W = 2, 8, 16, 16, 16
    key = jax.random.PRNGKey(0)
    kx, kw, kb, kg, kbe, km, kv = jax.random.split(key, 7)

    x = jax.random.normal(kx, (N, Cin, H, W), jnp.float32)          # NCHW, like PyTorch

    # p6_conv parameters (torch weight is (Cout, Cin, 1, 1); stored here as (Cin, Cout))
    w = jax.random.normal(kw, (Cin, Cout), jnp.float32) * 0.1
    b = jax.random.normal(kb, (Cout,), jnp.float32) * 0.1
    # BatchNorm (eval mode) parameters / running stats
    gamma = 1.0 + 0.1 * jax.random.normal(kg, (Cout,), jnp.float32)
    beta = 0.1 * jax.random.normal(kbe, (Cout,), jnp.float32)
    running_mean = 0.1 * jax.random.normal(km, (Cout,), jnp.float32)
    running_var = 1.0 + 0.1 * jnp.abs(jax.random.normal(kv, (Cout,), jnp.float32))
    eps = 1e-5

    # fold conv bias + BN into a per-channel scale/shift applied around the matmul
    scale = gamma / jnp.sqrt(running_var + eps)
    shift = (b - running_mean) * scale + beta
    params = {"w": w, "scale": scale, "shift": shift}

    p6, p7 = bifpn_p6p7_forward(x, params)
    jax.block_until_ready((p6, p7))

    p6_ref, p7_ref = _reference(x, w, b, gamma, beta, running_mean, running_var, eps)
    np.testing.assert_allclose(np.asarray(p6), np.asarray(p6_ref), rtol=1e-3, atol=1e-3)
    np.testing.assert_allclose(np.asarray(p7), np.asarray(p7_ref), rtol=1e-3, atol=1e-3)
    assert p6.shape == (N, Cout, H // 2, W // 2) and p7.shape == (N, Cout, H // 4, W // 4)

    print("KERNEL_OK")
</pallas_src>

<mosaic_0001>
module attributes {stable_mosaic.version = 11 : i64} {
  func.func @_bifpn_p6p7_kernel(%arg0: i32, %arg1: memref<1x8x256xf32, #tpu.memory_space<vmem>>, %arg2: memref<128x8xf32, #tpu.memory_space<vmem>>, %arg3: memref<1x128xf32, #tpu.memory_space<vmem>>, %arg4: memref<1x8x8x128xf32, #tpu.memory_space<vmem>>, %arg5: memref<1x4x4x128xf32, #tpu.memory_space<vmem>>, %arg6: memref<18x18x128xf32, #tpu.memory_space<vmem>>, %arg7: memref<10x10x128xf32, #tpu.memory_space<vmem>>) attributes {dimension_semantics = [#tpu.dimension_semantics<parallel>], iteration_bounds = array<i64: 2>, scalar_prefetch = 0 : i64, scratch_operands = 2 : i64, tpu.core_type = #tpu.core_type<tc>, window_params = [{transform_indices = @transform_0, window_bounds = array<i64: 1, 8, 256>}, {pipeline_mode = #tpu.pipeline_mode<synchronous>, transform_indices = @transform_1, window_bounds = array<i64: 128, 8>}, {pipeline_mode = #tpu.pipeline_mode<synchronous>, transform_indices = @transform_2, window_bounds = array<i64: 1, 128>}, {transform_indices = @transform_3, window_bounds = array<i64: 1, 8, 8, 128>}, {transform_indices = @transform_4, window_bounds = array<i64: 1, 4, 4, 128>}]} {
    %c0 = arith.constant 0 : index
    %c0_0 = arith.constant 0 : index
    %0 = vector.load %arg2[%c0, %c0_0] : memref<128x8xf32, #tpu.memory_space<vmem>>, vector<128x8xf32>
    %c0_1 = arith.constant 0 : index
    %c0_2 = arith.constant 0 : index
    %c0_3 = arith.constant 0 : index
    %1 = vector.load %arg1[%c0_1, %c0_2, %c0_3] : memref<1x8x256xf32, #tpu.memory_space<vmem>>, vector<1x8x256xf32>
    %2 = vector.shape_cast %1 : vector<1x8x256xf32> to vector<8x256xf32>
    %cst = arith.constant dense<0.000000e+00> : vector<128x256xf32>
    %3 = tpu.matmul %0, %2, %cst {dimension_numbers = #tpu.dot_dimension_numbers<[1], [0], [0], [1], [0, 0, 1, 1], [], []>} : vector<128x8xf32>, vector<8x256xf32>, vector<128x256xf32> -> vector<128x256xf32>
    %4 = tpu.transpose %3, [1, 0] : vector<128x256xf32> -> vector<256x128xf32>
    %c0_4 = arith.constant 0 : index
    %c0_5 = arith.constant 0 : index
    %5 = vector.load %arg3[%c0_4, %c0_5] : memref<1x128xf32, #tpu.memory_space<vmem>>, vector<1x128xf32>
    %6 = vector.broadcast %5 : vector<1x128xf32> to vector<256x128xf32>
    %7 = arith.addf %4, %6 : vector<256x128xf32>
    %cst_6 = arith.constant 0.000000e+00 : f32
    %8 = vector.broadcast %cst_6 : f32 to vector<18x18x128xf32>
    %c0_7 = arith.constant 0 : index
    %c0_8 = arith.constant 0 : index
    %c0_9 = arith.constant 0 : index
    %9 = vector.load %arg6[%c0_7, %c0_8, %c0_9] : memref<18x18x128xf32, #tpu.memory_space<vmem>>, vector<18x18x128xf32>
    tpu.vector_store %arg6[%c0_7, %c0_8, %c0_9], %8 {strides = array<i32>} : memref<18x18x128xf32, #tpu.memory_space<vmem>>, vector<18x18x128xf32>,
    %cst_10 = arith.constant 0.000000e+00 : f32
    %10 = vector.broadcast %cst_10 : f32 to vector<10x10x128xf32>
    %c0_11 = arith.constant 0 : index
    %c0_12 = arith.constant 0 : index
    %c0_13 = arith.constant 0 : index
    %11 = vector.load %arg7[%c0_11, %c0_12, %c0_13] : memref<10x10x128xf32, #tpu.memory_space<vmem>>, vector<10x10x128xf32>
    tpu.vector_store %arg7[%c0_11, %c0_12, %c0_13], %10 {strides = array<i32>} : memref<10x10x128xf32, #tpu.memory_space<vmem>>, vector<10x10x128xf32>,
    %12 = vector.shape_cast %7 : vector<256x128xf32> to vector<16x16x128xf32>
    %c0_14 = arith.constant 0 : index
    %c0_15 = arith.constant 0 : index
    %c0_16 = arith.constant 0 : index
    %13 = vector.load %arg6[%c0_14, %c0_15, %c0_16] : memref<18x18x128xf32, #tpu.memory_space<vmem>>, vector<16x16x128xf32>
    tpu.vector_store %arg6[%c0_14, %c0_15, %c0_16], %12 {strides = array<i32>} : memref<18x18x128xf32, #tpu.memory_space<vmem>>, vector<16x16x128xf32>,
    %c0_17 = arith.constant 0 : index
    %c0_18 = arith.constant 0 : index
    %c0_19 = arith.constant 0 : index
    %14 = tpu.strided_load %arg6[%c0_17, %c0_18, %c0_19] {strides = array<i32: 1, 2, 1>} : memref<18x18x128xf32, #tpu.memory_space<vmem>>, vector<18x8x128xf32>
    %c0_20 = arith.constant 0 : index
    %c1 = arith.constant 1 : index
    %c0_21 = arith.constant 0 : index
    %15 = tpu.strided_load %arg6[%c0_20, %c1, %c0_21] {strides = array<i32: 1, 2, 1>} : memref<18x18x128xf32, #tpu.memory_space<vmem>>, vector<18x8x128xf32>
    %c0_22 = arith.constant 0 : index
    %c2 = arith.constant 2 : index
    %c0_23 = arith.constant 0 : index
    %16 = tpu.strided_load %arg6[%c0_22, %c2, %c0_23] {strides = array<i32: 1, 2, 1>} : memref<18x18x128xf32, #tpu.memory_space<vmem>>, vector<18x8x128xf32>
    %17 = arith.maximumf %14, %15 : vector<18x8x128xf32>
    %18 = arith.maximumf %17, %16 : vector<18x8x128xf32>
    %19 = vector.shape_cast %18 : vector<18x8x128xf32> to vector<9x2x8x128xf32>
    %20 = vector.extract_strided_slice %19 {offsets = [0, 0, 0, 0], sizes = [9, 1, 8, 128], strides = [1, 1, 1, 1]} : vector<9x2x8x128xf32> to vector<9x1x8x128xf32>
    %21 = vector.shape_cast %20 : vector<9x1x8x128xf32> to vector<9x8x128xf32>
    %22 = vector.extract_strided_slice %19 {offsets = [0, 1, 0, 0], sizes = [9, 1, 8, 128], strides = [1, 1, 1, 1]} : vector<9x2x8x128xf32> to vector<9x1x8x128xf32>
    %23 = vector.shape_cast %22 : vector<9x1x8x128xf32> to vector<9x8x128xf32>
    %24 = vector.extract_strided_slice %21 {offsets = [0, 0, 0], sizes = [8, 8, 128], strides = [1, 1, 1]} : vector<9x8x128xf32> to vector<8x8x128xf32>
    %25 = vector.extract_strided_slice %23 {offsets = [0, 0, 0], sizes = [8, 8, 128], strides = [1, 1, 1]} : vector<9x8x128xf32> to vector<8x8x128xf32>
    %26 = arith.maximumf %24, %25 : vector<8x8x128xf32>
    %27 = vector.extract_strided_slice %21 {offsets = [1, 0, 0], sizes = [8, 8, 128], strides = [1, 1, 1]} : vector<9x8x128xf32> to vector<8x8x128xf32>
    %28 = arith.maximumf %26, %27 : vector<8x8x128xf32>
    %c0_24 = arith.constant 0 : index
    %c0_25 = arith.constant 0 : index
    %c0_26 = arith.constant 0 : index
    %c0_27 = arith.constant 0 : index
    %29 = vector.load %arg4[%c0_24, %c0_25, %c0_26, %c0_27] : memref<1x8x8x128xf32, #tpu.memory_space<vmem>>, vector<1x8x8x128xf32>
    %30 = vector.shape_cast %29 : vector<1x8x8x128xf32> to vector<8x8x128xf32>
    %31 = vector.shape_cast %28 : vector<8x8x128xf32> to vector<1x8x8x128xf32>
    tpu.vector_store %arg4[%c0_24, %c0_25, %c0_26, %c0_27], %31 {strides = array<i32>} : memref<1x8x8x128xf32, #tpu.memory_space<vmem>>, vector<1x8x8x128xf32>,
    %c0_28 = arith.constant 0 : index
    %c0_29 = arith.constant 0 : index
    %c0_30 = arith.constant 0 : index
    %32 = vector.load %arg7[%c0_28, %c0_29, %c0_30] : memref<10x10x128xf32, #tpu.memory_space<vmem>>, vector<8x8x128xf32>
    tpu.vector_store %arg7[%c0_28, %c0_29, %c0_30], %28 {strides = array<i32>} : memref<10x10x128xf32, #tpu.memory_space<vmem>>, vector<8x8x128xf32>,
    %c0_31 = arith.constant 0 : index
    %c0_32 = arith.constant 0 : index
    %c0_33 = arith.constant 0 : index
    %33 = tpu.strided_load %arg7[%c0_31, %c0_32, %c0_33] {strides = array<i32: 1, 2, 1>} : memref<10x10x128xf32, #tpu.memory_space<vmem>>, vector<10x4x128xf32>
    %c0_34 = arith.constant 0 : index
    %c1_35 = arith.constant 1 : index
    %c0_36 = arith.constant 0 : index
    %34 = tpu.strided_load %arg7[%c0_34, %c1_35, %c0_36] {strides = array<i32: 1, 2, 1>} : memref<10x10x128xf32, #tpu.memory_space<vmem>>, vector<10x4x128xf32>
    %c0_37 = arith.constant 0 : index
    %c2_38 = arith.constant 2 : index
    %c0_39 = arith.constant 0 : index
    %35 = tpu.strided_load %arg7[%c0_37, %c2_38, %c0_39] {strides = array<i32: 1, 2, 1>} : memref<10x10x128xf32, #tpu.memory_space<vmem>>, vector<10x4x128xf32>
    %36 = arith.maximumf %33, %34 : vector<10x4x128xf32>
    %37 = arith.maximumf %36, %35 : vector<10x4x128xf32>
    %38 = vector.shape_cast %37 : vector<10x4x128xf32> to vector<5x2x4x128xf32>
    %39 = vector.extract_strided_slice %38 {offsets = [0, 0, 0, 0], sizes = [5, 1, 4, 128], strides = [1, 1, 1, 1]} : vector<5x2x4x128xf32> to vector<5x1x4x128xf32>
    %40 = vector.shape_cast %39 : vector<5x1x4x128xf32> to vector<5x4x128xf32>
    %41 = vector.extract_strided_slice %38 {offsets = [0, 1, 0, 0], sizes = [5, 1, 4, 128], strides = [1, 1, 1, 1]} : vector<5x2x4x128xf32> to vector<5x1x4x128xf32>
    %42 = vector.shape_cast %41 : vector<5x1x4x128xf32> to vector<5x4x128xf32>
    %43 = vector.extract_strided_slice %40 {offsets = [0, 0, 0], sizes = [4, 4, 128], strides = [1, 1, 1]} : vector<5x4x128xf32> to vector<4x4x128xf32>
    %44 = vector.extract_strided_slice %42 {offsets = [0, 0, 0], sizes = [4, 4, 128], strides = [1, 1, 1]} : vector<5x4x128xf32> to vector<4x4x128xf32>
    %45 = arith.maximumf %43, %44 : vector<4x4x128xf32>
    %46 = vector.extract_strided_slice %40 {offsets = [1, 0, 0], sizes = [4, 4, 128], strides = [1, 1, 1]} : vector<5x4x128xf32> to vector<4x4x128xf32>
    %47 = arith.maximumf %45, %46 : vector<4x4x128xf32>
    %c0_40 = arith.constant 0 : index
    %c0_41 = arith.constant 0 : index
    %c0_42 = arith.constant 0 : index
    %c0_43 = arith.constant 0 : index
    %48 = vector.load %arg5[%c0_40, %c0_41, %c0_42, %c0_43] : memref<1x4x4x128xf32, #tpu.memory_space<vmem>>, vector<1x4x4x128xf32>
    %49 = vector.shape_cast %48 : vector<1x4x4x128xf32> to vector<4x4x128xf32>
    %50 = vector.shape_cast %47 : vector<4x4x128xf32> to vector<1x4x4x128xf32>
    tpu.vector_store %arg5[%c0_40, %c0_41, %c0_42, %c0_43], %50 {strides = array<i32>} : memref<1x4x4x128xf32, #tpu.memory_space<vmem>>, vector<1x4x4x128xf32>,
    return
  }
  func.func @transform_0(%arg0: i32) -> (i32, i32, i32) {
    %c0_i32 = arith.constant 0 : i32
    %c0_i32_0 = arith.constant 0 : i32
    %c0_i32_1 = arith.constant 0 : i32
    return %arg0, %c0_i32, %c0_i32_0 : i32, i32, i32
  }
  func.func @transform_1(%arg0: i32) -> (i32, i32) {
    %c0_i32 = arith.constant 0 : i32
    %c0_i32_0 = arith.constant 0 : i32
    %c0_i32_1 = arith.constant 0 : i32
    return %c0_i32, %c0_i32_0 : i32, i32
  }
  func.func @transform_2(%arg0: i32) -> (i32, i32) {
    %c0_i32 = arith.constant 0 : i32
    %c0_i32_0 = arith.constant 0 : i32
    %c0_i32_1 = arith.constant 0 : i32
    return %c0_i32, %c0_i32_0 : i32, i32
  }
  func.func @transform_3(%arg0: i32) -> (i32, i32, i32, i32) {
    %c0_i32 = arith.constant 0 : i32
    %c0_i32_0 = arith.constant 0 : i32
    %c0_i32_1 = arith.constant 0 : i32
    %c0_i32_2 = arith.constant 0 : i32
    return %arg0, %c0_i32, %c0_i32_0, %c0_i32_1 : i32, i32, i32, i32
  }
  func.func @transform_4(%arg0: i32) -> (i32, i32, i32, i32) {
    %c0_i32 = arith.constant 0 : i32
    %c0_i32_0 = arith.constant 0 : i32
    %c0_i32_1 = arith.constant 0 : i32
    %c0_i32_2 = arith.constant 0 : i32
    return %arg0, %c0_i32, %c0_i32_0, %c0_i32_1 : i32, i32, i32, i32
  }
}

</mosaic_0001>

<llo_original>
// kernel: tpu_custom_call.1
$region0: #{tpu_custom_call.1}
  #allocation0 [shape = 'u32[]', space=smem, size = 0x4, offset = 0x4, fixed_abs, tag = 'smem constant byte address 0x4 - core index']
  #allocation1 [shape = 'u32[72,128]{1,0:T(1,128)}', space=vmem, size = 0x9000, scoped, tag = 'internal scratch']
  #allocation2 [shape = 'f32[18,18,128]{2,1,0:T(8,128)}', space=vmem, size = 0x36000, scoped, tag = 'scratch operand']
  #allocation3 [shape = 'f32[10,10,128]{2,1,0:T(8,128)}', space=vmem, size = 0x14000, scoped, tag = 'scratch operand']
  %s0 = inlined_call_operand.vmem [shape: f32[2,8,256], index: 0, kind: input, shape index: {}]
  %s1 = inlined_call_operand.vmem [shape: f32[128,8], index: 1, kind: input, shape index: {}]
  %s2 = inlined_call_operand.vmem [shape: f32[1,128], index: 2, kind: input, shape index: {}]
  %s3 = inlined_call_operand.hbm [shape: f32[2,8,8,128], index: 3, kind: output, shape index: {0}]
  %s4 = inlined_call_operand.hbm [shape: f32[2,4,4,128], index: 4, kind: output, shape index: {1}]
  %5 = xla_tuple %s3, %s4
  %s6 = sld [smem:[#allocation0]]
  $region53: #{tpu_custom_call.1} parent=0
    _
  %s8 = ssub.s32 1, %s6
  %s9 = scalar_select 0, %s8, %s6
  $region1: #{tpu_custom_call.1} parent=0
    #allocation4 [shape = 'u8[65536]{0}', space=vmem, size = 0x10000, scoped, tag = 'output window, operand 0']
    #allocation5 [shape = 's32[2]{0}', space=sflag, size = 0x8, scoped, tag = 'scoped memory for tpu_custom_call.1']
    #allocation6 [shape = 'u8[16384]{0}', space=vmem, size = 0x4000, scoped, tag = 'output window, operand 1']
    #allocation7 [shape = 's32[2]{0}', space=sflag, size = 0x8, scoped, tag = 'scoped memory for tpu_custom_call.1']
    %10 = vsyncpa [#allocation5], 0
    %s11 = scalar_lea.sflag [#allocation5], 1
    %12 = vsyncpa %s11, 0
    %13 = vsyncpa [#allocation7], 0
    %s14 = scalar_lea.sflag [#allocation7], 1
    %15 = vsyncpa %s14, 0
    loop: start=0, step=1, limit=4
    $region2: #{tpu_custom_call.1} parent=1 // loop_pre_header
      _
    $region3: #{tpu_custom_call.1} parent=1 // loop_header
      %s17 = sphi 0, %s21
      %p18 = scmp.ge.s32.totalorder %s17, 4
      %s27 = sphi 0, %s29
      %s30 = sphi 0, %s27
      %s31 = sphi 0, %s30
      %s47 = sphi 0, %s31
      %s51 = sphi 0, %s51
      %s53 = sphi 0, %s51
      %s54 = sphi 0, %s53
      %s68 = sphi 0, %s54
      %s72 = sphi 0, %s72
      %s74 = sphi 0, %s72
      %s75 = sphi 0, %s74
      %s89 = sphi 0, %s75
      %s95 = sphi 0, %s97
      %s98 = sphi 0, %s95
      %s99 = sphi 0, %s98
      %s115 = sphi 0, %s99
      %s121 = sphi 0, %s123
      %s124 = sphi 0, %s121
      %s125 = sphi 0, %s124
      %s141 = sphi 0, %s125
    $region4: #{tpu_custom_call.1} parent=1 // loop_header_branch
      %20 = sbr.rel (%p18) target = $region8
    $region5: #{tpu_custom_call.1} parent=1 // loop_body
      %s22 = ssub.s32 %s17, 1
      %s23 = ssub.s32 %s17, 2
      %s24 = sadd.s32 %s17, 1
      %s25 = ssub.s32 %s17, %s24
      %p26 = scmp.eq.s32.totalorder %s25, 0
      %s28 = sadd.s32 %s27, 1
      %s29 = scalar_select %p26, %s27, %s28
      %p32 = pneg %p26
      %p33 = scmp.eq.s32.totalorder %s17, 1
      %p34 = por %p32, %p33
      %p35 = scmp.ne.s32.totalorder %s27, %s30
      %p36 = scmp.eq.s32.totalorder %s17, 0
      %p37 = por %p35, %p36
      %p38 = scmp.ne.s32.totalorder %s27, %s30
      %p39 = scmp.eq.s32.totalorder %s22, 1
      %p40 = por %p38, %p39
      %p41 = scmp.ne.s32.totalorder %s30, %s31
      %p42 = scmp.eq.s32.totalorder %s22, 0
      %p43 = por %p41, %p42
      %p44 = scmp.ne.s32.totalorder %s30, %s31
      %p45 = scmp.eq.s32.totalorder %s23, 1
      %p46 = por %p44, %p45
      %p48 = scmp.ne.s32.totalorder %s31, %s47
      %p49 = scmp.eq.s32.totalorder %s23, 0
      %p50 = por %p48, %p49
      %s52 = sadd.s32 %s51, 1
      %p55 = scmp.eq.s32.totalorder %s17, 1
      %p56 = scmp.ne.s32.totalorder %s51, %s53
      %p57 = scmp.eq.s32.totalorder %s17, 0
      %p58 = por %p56, %p57
      %p59 = scmp.ne.s32.totalorder %s51, %s53
      %p60 = scmp.eq.s32.totalorder %s22, 1
      %p61 = por %p59, %p60
      %p62 = scmp.ne.s32.totalorder %s53, %s54
      %p63 = scmp.eq.s32.totalorder %s22, 0
      %p64 = por %p62, %p63
      %p65 = scmp.ne.s32.totalorder %s53, %s54
      %p66 = scmp.eq.s32.totalorder %s23, 1
      %p67 = por %p65, %p66
      %p69 = scmp.ne.s32.totalorder %s54, %s68
      %p70 = scmp.eq.s32.totalorder %s23, 0
      %p71 = por %p69, %p70
      %s73 = sadd.s32 %s72, 1
      %p76 = scmp.eq.s32.totalorder %s17, 1
      %p77 = scmp.ne.s32.totalorder %s72, %s74
      %p78 = scmp.eq.s32.totalorder %s17, 0
      %p79 = por %p77, %p78
      %p80 = scmp.ne.s32.totalorder %s72, %s74
      %p81 = scmp.eq.s32.totalorder %s22, 1
      %p82 = por %p80, %p81
      %p83 = scmp.ne.s32.totalorder %s74, %s75
      %p84 = scmp.eq.s32.totalorder %s22, 0
      %p85 = por %p83, %p84
      %p86 = scmp.ne.s32.totalorder %s74, %s75
      %p87 = scmp.eq.s32.totalorder %s23, 1
      %p88 = por %p86, %p87
      %p90 = scmp.ne.s32.totalorder %s75, %s89
      %p91 = scmp.eq.s32.totalorder %s23, 0
      %p92 = por %p90, %p91
      %s93 = ssub.s32 %s17, %s24
      %p94 = scmp.eq.s32.totalorder %s93, 0
      %s96 = sadd.s32 %s95, 1
      %s97 = scalar_select %p94, %s95, %s96
      %p100 = pneg %p94
      %p101 = scmp.eq.s32.totalorder %s17, 1
      %p102 = por %p100, %p101
      %p103 = scmp.ne.s32.totalorder %s95, %s98
      %p104 = scmp.eq.s32.totalorder %s17, 0
      %p105 = por %p103, %p104
      %p106 = scmp.ne.s32.totalorder %s95, %s98
      %p107 = scmp.eq.s32.totalorder %s22, 1
      %p108 = por %p106, %p107
      %p109 = scmp.ne.s32.totalorder %s98, %s99
      %p110 = scmp.eq.s32.totalorder %s22, 0
      %p111 = por %p109, %p110
      %p112 = scmp.ne.s32.totalorder %s98, %s99
      %p113 = scmp.eq.s32.totalorder %s23, 1
      %p114 = por %p112, %p113
      %p116 = scmp.ne.s32.totalorder %s99, %s115
      %p117 = scmp.eq.s32.totalorder %s23, 0
      %p118 = por %p116, %p117
      %s119 = ssub.s32 %s17, %s24
      %p120 = scmp.eq.s32.totalorder %s119, 0
      %s122 = sadd.s32 %s121, 1
      %s123 = scalar_select %p120, %s121, %s122
      %p126 = pneg %p120
      %p127 = scmp.eq.s32.totalorder %s17, 1
      %p128 = por %p126, %p127
      %p129 = scmp.ne.s32.totalorder %s121, %s124
      %p130 = scmp.eq.s32.totalorder %s17, 0
      %p131 = por %p129, %p130
      %p132 = scmp.ne.s32.totalorder %s121, %s124
      %p133 = scmp.eq.s32.totalorder %s22, 1
      %p134 = por %p132, %p133
      %p135 = scmp.ne.s32.totalorder %s124, %s125
      %p136 = scmp.eq.s32.totalorder %s22, 0
      %p137 = por %p135, %p136
      %p138 = scmp.ne.s32.totalorder %s124, %s125
      %p139 = scmp.eq.s32.totalorder %s23, 1
      %p140 = por %p138, %p139
      %p142 = scmp.ne.s32.totalorder %s125, %s141
      %p143 = scmp.eq.s32.totalorder %s23, 0
      %p144 = por %p142, %p143
      %p145 = scmp.le.s32.totalorder 1, %s17
      %p146 = scmp.lt.s32.totalorder %s17, 3
      %p147 = pnand %p145, %p146
      %p148 = pneg %p147
      // Predicated region
      $region9: #{tpu_custom_call.1} parent=5 // pred_check
        _
      $region10: #{tpu_custom_call.1} parent=5 // pred_check_branch
        %150 = sbr.rel (%p147) target = $region12
      $region11: #{tpu_custom_call.1} parent=5 // pred_region
        %s151 = ssub.s32 %s17, 1
        // Predicated region
        $region13: #{tpu_custom_call.1} parent=11 // pred_check
          %p152 = pneg %p64
        $region14: #{tpu_custom_call.1} parent=11 // pred_check_branch
          %154 = sbr.rel (%p152) target = $region16
        $region15: #{tpu_custom_call.1} parent=11 // pred_region
          _
        $region16: #{tpu_custom_call.1} parent=11 // pred_fallthru
          _
        // Predicated region
        $region17: #{tpu_custom_call.1} parent=11 // pred_check
          %p155 = pneg %p85
        $region18: #{tpu_custom_call.1} parent=11 // pred_check_branch
          %157 = sbr.rel (%p155) target = $region20
        $region19: #{tpu_custom_call.1} parent=11 // pred_region
          _
        $region20: #{tpu_custom_call.1} parent=11 // pred_fallthru
          _
      $region12: #{tpu_custom_call.1} parent=5 // pred_fallthru
        _
      %p158 = scmp.lt.s32.totalorder %s17, 2
      // Predicated region
      $region21: #{tpu_custom_call.1} parent=5 // pred_check
        %p159 = pneg %p158
      $region22: #{tpu_custom_call.1} parent=5 // pred_check_branch
        %161 = sbr.rel (%p159) target = $region24
      $region23: #{tpu_custom_call.1} parent=5 // pred_region
        // Predicated region
        $region25: #{tpu_custom_call.1} parent=23 // pred_check
          %p162 = pneg %p37
        $region26: #{tpu_custom_call.1} parent=23 // pred_check_branch
          %164 = sbr.rel (%p162) target = $region28
        $region27: #{tpu_custom_call.1} parent=23 // pred_region
          %p165 = scmp.lt.s32.totalorder %s17, 1
          %s166 = scalar_select %p165, %s17, 1
          %s167 = smul.addr %s166, 2
          %s168 = smul.addr %s167, 8
          %s169 = scalar_lea.vmem %s0, %s168
        $region28: #{tpu_custom_call.1} parent=23 // pred_fallthru
          _
      $region24: #{tpu_custom_call.1} parent=5 // pred_fallthru
        _
      %p170 = scmp.le.s32.totalorder 1, %s17
      %p171 = scmp.lt.s32.totalorder %s17, 3
      %p172 = pnand %p170, %p171
      %p173 = pneg %p172
      // Predicated region
      $region29: #{tpu_custom_call.1} parent=5 // pred_check
        _
      $region30: #{tpu_custom_call.1} parent=5 // pred_check_branch
        %175 = sbr.rel (%p172) target = $region32
      $region31: #{tpu_custom_call.1} parent=5 // pred_region
        %s176 = ssub.s32 %s17, 1
        %p177 = scmp.lt.s32.totalorder %s22, 1
        %s178 = scalar_select %p177, %s22, 1
        %s179 = smul.addr %s178, 2
        %s180 = smul.addr %s179, 8
        %s181 = scalar_lea.vmem %s0, %s180
        %p182 = pneg %p43
        %p183 = pneg %p40
        %p184 = pneg %p64
        %p185 = pneg %p61
        %p186 = pneg %p85
        %p187 = pneg %p82
        %p188 = pneg %p111
        %p189 = pneg %p108
        %s190 = sand.u32 %s98, 1
        %s191 = scalar_lea.sflag [#allocation5], %s190
        %s192 = sand.u32 %s98, 1
        %s193 = smul.addr %s192, 64
        %s194 = scalar_lea.vmem [#allocation4], %s193
        %p195 = pneg %p137
        %p196 = pneg %p134
        %s197 = sand.u32 %s124, 1
        %s198 = scalar_lea.sflag [#allocation7], %s197
        %s199 = sand.u32 %s124, 1
        %s200 = smul.addr %s199, 16
        %s201 = scalar_lea.vmem [#allocation6], %s200
        %p202 = scmp.lt.s32.totalorder %s22, 1
        %s203 = scalar_select %p202, %s22, 1
        %s204 = smul.addr %s203, 2
        %s205 = smul.addr %s204, 8
        %s206 = scalar_lea.vmem %s0, %s205
        %v207 = vld [vmem:[%s1] sm:$0xff]
        %v208 = vld [vmem:[%s1 + $0x8] sm:$0xff]
        %v209 = vld [vmem:[%s1 + $0x10] sm:$0xff]
        %v210 = vld [vmem:[%s1 + $0x18] sm:$0xff]
        %v211 = vld [vmem:[%s1 + $0x20] sm:$0xff]
        %v212 = vld [vmem:[%s1 + $0x28] sm:$0xff]
        %v213 = vld [vmem:[%s1 + $0x30] sm:$0xff]
        %v214 = vld [vmem:[%s1 + $0x38] sm:$0xff]
        %v215 = vld [vmem:[%s1 + $0x40] sm:$0xff]
        %v216 = vld [vmem:[%s1 + $0x48] sm:$0xff]
        %v217 = vld [vmem:[%s1 + $0x50] sm:$0xff]
        %v218 = vld [vmem:[%s1 + $0x58] sm:$0xff]
        %v219 = vld [vmem:[%s1 + $0x60] sm:$0xff]
        %v220 = vld [vmem:[%s1 + $0x68] sm:$0xff]
        %v221 = vld [vmem:[%s1 + $0x70] sm:$0xff]
        %v222 = vld [vmem:[%s1 + $0x78] sm:$0xff]
        %v223 = vld [vmem:[%s206] sm:$0xff]
        %v224 = vld [vmem:[%s206 + $0x8] sm:$0xff]
        %vm225 = vcmask 64512
        %v227 = vsel %vm225, %v207, 0
        %v230 = vsel %vm225, %v208, 0
        %v233 = vsel %vm225, %v209, 0
        %v236 = vsel %vm225, %v210, 0
        %v239 = vsel %vm225, %v211, 0
        %v242 = vsel %vm225, %v212, 0
        %v245 = vsel %vm225, %v213, 0
        %v248 = vsel %vm225, %v214, 0
        %v251 = vsel %vm225, %v215, 0
        %v254 = vsel %vm225, %v216, 0
        %v257 = vsel %vm225, %v217, 0
        %v260 = vsel %vm225, %v218, 0
        %v263 = vsel %vm225, %v219, 0
        %v266 = vsel %vm225, %v220, 0
        %v269 = vsel %vm225, %v221, 0
        %v272 = vsel %vm225, %v222, 0
        %274 = vmatpush.msra.mxu0 0.0
        %275 = vmatpush.msra.mxu0 0.0
        %276 = vmatpush.msra.mxu0 0.0
        %277 = vmatpush.msra.mxu0 0.0
        %278 = vmatpush.msra.mxu0 0.0
        %279 = vmatpush.msra.mxu0 0.0
        %280 = vmatpush.msra.mxu0 0.0
        %281 = vmatpush.msra.mxu0 0.0
        %282 = vmatpush.msra.mxu0 0.0
        %283 = vmatpush.msra.mxu0 0.0
        %284 = vmatpush.msra.mxu0 0.0
        %285 = vmatpush.msra.mxu0 0.0
        %286 = vmatpush.msra.mxu0 0.0
        %287 = vmatpush.msra.mxu0 0.0
        %288 = vmatpush.msra.mxu0 0.0
        %289 = vmatpush.msra.mxu0 %v223
        %290 = vmatmul.f32.gmra.mxu0 %v227
        %v291 = vpop.f32.mrf.mxu0
        %v292 = vadd.f32 0.0, %v291
        %293 = vmatmul.f32.gmra.mxu0 %v230
        %v294 = vpop.f32.mrf.mxu0
        %v295 = vadd.f32 0.0, %v294
        %296 = vmatmul.f32.gmra.mxu0 %v233
        %v297 = vpop.f32.mrf.mxu0
        %v298 = vadd.f32 0.0, %v297
        %299 = vmatmul.f32.gmra.mxu0 %v236
        %v300 = vpop.f32.mrf.mxu0
        %v301 = vadd.f32 0.0, %v300
        %302 = vmatmul.f32.gmra.mxu0 %v239
        %v303 = vpop.f32.mrf.mxu0
        %v304 = vadd.f32 0.0, %v303
        %305 = vmatmul.f32.gmra.mxu0 %v242
        %v306 = vpop.f32.mrf.mxu0
        %v307 = vadd.f32 0.0, %v306
        %308 = vmatmul.f32.gmra.mxu0 %v245
        %v309 = vpop.f32.mrf.mxu0
        %v310 = vadd.f32 0.0, %v309
        %311 = vmatmul.f32.gmra.mxu0 %v248
        %v312 = vpop.f32.mrf.mxu0
        %v313 = vadd.f32 0.0, %v312
        %314 = vmatmul.f32.gmra.mxu0 %v251
        %v315 = vpop.f32.mrf.mxu0
        %v316 = vadd.f32 0.0, %v315
        %317 = vmatmul.f32.gmra.mxu0 %v254
        %v318 = vpop.f32.mrf.mxu0
        %v319 = vadd.f32 0.0, %v318
        %320 = vmatmul.f32.gmra.mxu0 %v257
        %v321 = vpop.f32.mrf.mxu0
        %v322 = vadd.f32 0.0, %v321
        %323 = vmatmul.f32.gmra.mxu0 %v260
        %v324 = vpop.f32.mrf.mxu0
        %v325 = vadd.f32 0.0, %v324
        %326 = vmatmul.f32.gmra.mxu0 %v263
        %v327 = vpop.f32.mrf.mxu0
        %v328 = vadd.f32 0.0, %v327
        %329 = vmatmul.f32.gmra.mxu0 %v266
        %v330 = vpop.f32.mrf.mxu0
        %v331 = vadd.f32 0.0, %v330
        %332 = vmatmul.f32.gmra.mxu0 %v269
        %v333 = vpop.f32.mrf.mxu0
        %v334 = vadd.f32 0.0, %v333
        %335 = vmatmul.f32.gmra.mxu0 %v272
        %v336 = vpop.f32.mrf.mxu0
        %v337 = vadd.f32 0.0, %v336
        %338 = vdwg.mxu0
        %339 = vmatpush.msra.mxu0 0.0
        %340 = vmatpush.msra.mxu0 0.0
        %341 = vmatpush.msra.mxu0 0.0
        %342 = vmatpush.msra.mxu0 0.0
        %343 = vmatpush.msra.mxu0 0.0
        %344 = vmatpush.msra.mxu0 0.0
        %345 = vmatpush.msra.mxu0 0.0
        %346 = vmatpush.msra.mxu0 0.0
        %347 = vmatpush.msra.mxu0 0.0
        %348 = vmatpush.msra.mxu0 0.0
        %349 = vmatpush.msra.mxu0 0.0
        %350 = vmatpush.msra.mxu0 0.0
        %351 = vmatpush.msra.mxu0 0.0
        %352 = vmatpush.msra.mxu0 0.0
        %353 = vmatpush.msra.mxu0 0.0
        %354 = vmatpush.msra.mxu0 %v224
        %355 = vmatmul.f32.gmra.mxu0 %v227
        %v356 = vpop.f32.mrf.mxu0
        %v357 = vadd.f32 0.0, %v356
        %358 = vmatmul.f32.gmra.mxu0 %v230
        %v359 = vpop.f32.mrf.mxu0
        %v360 = vadd.f32 0.0, %v359
        %361 = vmatmul.f32.gmra.mxu0 %v233
        %v362 = vpop.f32.mrf.mxu0
        %v363 = vadd.f32 0.0, %v362
        %364 = vmatmul.f32.gmra.mxu0 %v236
        %v365 = vpop.f32.mrf.mxu0
        %v366 = vadd.f32 0.0, %v365
        %367 = vmatmul.f32.gmra.mxu0 %v239
        %v368 = vpop.f32.mrf.mxu0
        %v369 = vadd.f32 0.0, %v368
        %370 = vmatmul.f32.gmra.mxu0 %v242
        %v371 = vpop.f32.mrf.mxu0
        %v372 = vadd.f32 0.0, %v371
        %373 = vmatmul.f32.gmra.mxu0 %v245
        %v374 = vpop.f32.mrf.mxu0
        %v375 = vadd.f32 0.0, %v374
        %376 = vmatmul.f32.gmra.mxu0 %v248
        %v377 = vpop.f32.mrf.mxu0
        %v378 = vadd.f32 0.0, %v377
        %379 = vmatmul.f32.gmra.mxu0 %v251
        %v380 = vpop.f32.mrf.mxu0
        %v381 = vadd.f32 0.0, %v380
        %382 = vmatmul.f32.gmra.mxu0 %v254
        %v383 = vpop.f32.mrf.mxu0
        %v384 = vadd.f32 0.0, %v383
        %385 = vmatmul.f32.gmra.mxu0 %v257
        %v386 = vpop.f32.mrf.mxu0
        %v387 = vadd.f32 0.0, %v386
        %388 = vmatmul.f32.gmra.mxu0 %v260
        %v389 = vpop.f32.mrf.mxu0
        %v390 = vadd.f32 0.0, %v389
        %391 = vmatmul.f32.gmra.mxu0 %v263
        %v392 = vpop.f32.mrf.mxu0
        %v393 = vadd.f32 0.0, %v392
        %394 = vmatmul.f32.gmra.mxu0 %v266
        %v395 = vpop.f32.mrf.mxu0
        %v396 = vadd.f32 0.0, %v395
        %397 = vmatmul.f32.gmra.mxu0 %v269
        %v398 = vpop.f32.mrf.mxu0
        %v399 = vadd.f32 0.0, %v398
        %400 = vmatmul.f32.gmra.mxu0 %v272
        %v401 = vpop.f32.mrf.mxu0
        %v402 = vadd.f32 0.0, %v401
        %403 = vdwg.mxu0
        %404 = vxpose.xlu0.b32.start [1/16] %v292, 128
        %405 = vxpose.xlu0.b32.cont [2/16] %v295, 128
        %406 = vxpose.xlu0.b32.cont [3/16] %v298, 128
        %407 = vxpose.xlu0.b32.cont [4/16] %v301, 128
        %408 = vxpose.xlu0.b32.cont [5/16] %v304, 128
        %409 = vxpose.xlu0.b32.cont [6/16] %v307, 128
        %410 = vxpose.xlu0.b32.cont [7/16] %v310, 128
        %411 = vxpose.xlu0.b32.cont [8/16] %v313, 128
        %412 = vxpose.xlu0.b32.cont [9/16] %v316, 128
        %413 = vxpose.xlu0.b32.cont [10/16] %v319, 128
        %414 = vxpose.xlu0.b32.cont [11/16] %v322, 128
        %415 = vxpose.xlu0.b32.cont [12/16] %v325, 128
        %416 = vxpose.xlu0.b32.cont [13/16] %v328, 128
        %417 = vxpose.xlu0.b32.cont [14/16] %v331, 128
        %418 = vxpose.xlu0.b32.cont [15/16] %v334, 128
        %419 = vxpose.xlu0.b32.end [16/16] %v337, 128
        %v420 = vpop.trf.xlu0
        %v421 = vpop.trf.xlu0
        %v422 = vpop.trf.xlu0
        %v423 = vpop.trf.xlu0
        %v424 = vpop.trf.xlu0
        %v425 = vpop.trf.xlu0
        %v426 = vpop.trf.xlu0
        %v427 = vpop.trf.xlu0
        %v428 = vpop.trf.xlu0
        %v429 = vpop.trf.xlu0
        %v430 = vpop.trf.xlu0
        %v431 = vpop.trf.xlu0
        %v432 = vpop.trf.xlu0
        %v433 = vpop.trf.xlu0
        %v434 = vpop.trf.xlu0
        %v435 = vpop.trf.xlu0
        %436 = vxpose.xlu0.b32.start [1/16] %v357, 128
        %437 = vxpose.xlu0.b32.cont [2/16] %v360, 128
        %438 = vxpose.xlu0.b32.cont [3/16] %v363, 128
        %439 = vxpose.xlu0.b32.cont [4/16] %v366, 128
        %440 = vxpose.xlu0.b32.cont [5/16] %v369, 128
        %441 = vxpose.xlu0.b32.cont [6/16] %v372, 128
        %442 = vxpose.xlu0.b32.cont [7/16] %v375, 128
        %443 = vxpose.xlu0.b32.cont [8/16] %v378, 128
        %444 = vxpose.xlu0.b32.cont [9/16] %v381, 128
        %445 = vxpose.xlu0.b32.cont [10/16] %v384, 128
        %446 = vxpose.xlu0.b32.cont [11/16] %v387, 128
        %447 = vxpose.xlu0.b32.cont [12/16] %v390, 128
        %448 = vxpose.xlu0.b32.cont [13/16] %v393, 128
        %449 = vxpose.xlu0.b32.cont [14/16] %v396, 128
        %450 = vxpose.xlu0.b32.cont [15/16] %v399, 128
        %451 = vxpose.xlu0.b32.end [16/16] %v402, 128
        %v452 = vpop.trf.xlu0
        %v453 = vpop.trf.xlu0
        %v454 = vpop.trf.xlu0
        %v455 = vpop.trf.xlu0
        %v456 = vpop.trf.xlu0
        %v457 = vpop.trf.xlu0
        %v458 = vpop.trf.xlu0
        %v459 = vpop.trf.xlu0
        %v460 = vpop.trf.xlu0
        %v461 = vpop.trf.xlu0
        %v462 = vpop.trf.xlu0
        %v463 = vpop.trf.xlu0
        %v464 = vpop.trf.xlu0
        %v465 = vpop.trf.xlu0
        %v466 = vpop.trf.xlu0
        %v467 = vpop.trf.xlu0
        %v468 = vld [vmem:[%s2] sm:$0x1]
        %v470 = vperm.slane %v468, 0
        %v472 = vadd.f32 %v420, %v470
        %v473 = vadd.f32 %v421, %v470
        %v474 = vadd.f32 %v422, %v470
        %v475 = vadd.f32 %v423, %v470
        %v476 = vadd.f32 %v424, %v470
        %v477 = vadd.f32 %v425, %v470
        %v478 = vadd.f32 %v426, %v470
        %v479 = vadd.f32 %v427, %v470
        %v480 = vadd.f32 %v428, %v470
        %v481 = vadd.f32 %v429, %v470
        %v482 = vadd.f32 %v430, %v470
        %v483 = vadd.f32 %v431, %v470
        %v484 = vadd.f32 %v432, %v470
        %v485 = vadd.f32 %v433, %v470
        %v486 = vadd.f32 %v434, %v470
        %v487 = vadd.f32 %v435, %v470
        %v488 = vadd.f32 %v452, %v470
        %v489 = vadd.f32 %v453, %v470
        %v490 = vadd.f32 %v454, %v470
        %v491 = vadd.f32 %v455, %v470
        %v492 = vadd.f32 %v456, %v470
        %v493 = vadd.f32 %v457, %v470
        %v494 = vadd.f32 %v458, %v470
        %v495 = vadd.f32 %v459, %v470
        %v496 = vadd.f32 %v460, %v470
        %v497 = vadd.f32 %v461, %v470
        %v498 = vadd.f32 %v462, %v470
        %v499 = vadd.f32 %v463, %v470
        %v500 = vadd.f32 %v464, %v470
        %v501 = vadd.f32 %v465, %v470
        %v502 = vadd.f32 %v466, %v470
        %v503 = vadd.f32 %v467, %v470
        %504 = vst [vmem:[#allocation2] sm:$0xff] 0.0
        %505 = vst [vmem:[#allocation2 + $0x8] sm:$0xff] 0.0
        %506 = vst [vmem:[#allocation2 + $0x10] sm:$0x3] 0.0
        %507 = vst [vmem:[#allocation2 + $0x18] sm:$0xff] 0.0
        %508 = vst [vmem:[#allocation2 + $0x20] sm:$0xff] 0.0
        %509 = vst [vmem:[#allocation2 + $0x28] sm:$0x3] 0.0
        %510 = vst [vmem:[#allocation2 + $0x30] sm:$0xff] 0.0
        %511 = vst [vmem:[#allocation2 + $0x38] sm:$0xff] 0.0
        %512 = vst [vmem:[#allocation2 + $0x40] sm:$0x3] 0.0
        %513 = vst [vmem:[#allocation2 + $0x48] sm:$0xff] 0.0
        %514 = vst [vmem:[#allocation2 + $0x50] sm:$0xff] 0.0
        %515 = vst [vmem:[#allocation2 + $0x58] sm:$0x3] 0.0
        %516 = vst [vmem:[#allocation2 + $0x60] sm:$0xff] 0.0
        %517 = vst [vmem:[#allocation2 + $0x68] sm:$0xff] 0.0
        %518 = vst [vmem:[#allocation2 + $0x70] sm:$0x3] 0.0
        %519 = vst [vmem:[#allocation2 + $0x78] sm:$0xff] 0.0
        %520 = vst [vmem:[#allocation2 + $0x80] sm:$0xff] 0.0
        %521 = vst [vmem:[#allocation2 + $0x88] sm:$0x3] 0.0
        %522 = vst [vmem:[#allocation2 + $0x90] sm:$0xff] 0.0
        %523 = vst [vmem:[#allocation2 + $0x98] sm:$0xff] 0.0
        %524 = vst [vmem:[#allocation2 + $0xa0] sm:$0x3] 0.0
        %525 = vst [vmem:[#allocation2 + $0xa8] sm:$0xff] 0.0
        %526 = vst [vmem:[#allocation2 + $0xb0] sm:$0xff] 0.0
        %527 = vst [vmem:[#allocation2 + $0xb8] sm:$0x3] 0.0
        %528 = vst [vmem:[#allocation2 + $0xc0] sm:$0xff] 0.0
        %529 = vst [vmem:[#allocation2 + $0xc8] sm:$0xff] 0.0
        %530 = vst [vmem:[#allocation2 + $0xd0] sm:$0x3] 0.0
        %531 = vst [vmem:[#allocation2 + $0xd8] sm:$0xff] 0.0
        %532 = vst [vmem:[#allocation2 + $0xe0] sm:$0xff] 0.0
        %533 = vst [vmem:[#allocation2 + $0xe8] sm:$0x3] 0.0
        %534 = vst [vmem:[#allocation2 + $0xf0] sm:$0xff] 0.0
        %535 = vst [vmem:[#allocation2 + $0xf8] sm:$0xff] 0.0
        %536 = vst [vmem:[#allocation2 + $0x100] sm:$0x3] 0.0
        %537 = vst [vmem:[#allocation2 + $0x108] sm:$0xff] 0.0
        %538 = vst [vmem:[#allocation2 + $0x110] sm:$0xff] 0.0
        %539 = vst [vmem:[#allocation2 + $0x118] sm:$0x3] 0.0
        %540 = vst [vmem:[#allocation2 + $0x120] sm:$0xff] 0.0
        %541 = vst [vmem:[#allocation2 + $0x128] sm:$0xff] 0.0
        %542 = vst [vmem:[#allocation2 + $0x130] sm:$0x3] 0.0
        %543 = vst [vmem:[#allocation2 + $0x138] sm:$0xff] 0.0
        %544 = vst [vmem:[#allocation2 + $0x140] sm:$0xff] 0.0
        %545 = vst [vmem:[#allocation2 + $0x148] sm:$0x3] 0.0
        %546 = vst [vmem:[#allocation2 + $0x150] sm:$0xff] 0.0
        %547 = vst [vmem:[#allocation2 + $0x158] sm:$0xff] 0.0
        %548 = vst [vmem:[#allocation2 + $0x160] sm:$0x3] 0.0
        %549 = vst [vmem:[#allocation2 + $0x168] sm:$0xff] 0.0
        %550 = vst [vmem:[#allocation2 + $0x170] sm:$0xff] 0.0
        %551 = vst [vmem:[#allocation2 + $0x178] sm:$0x3] 0.0
        %552 = vst [vmem:[#allocation2 + $0x180] sm:$0xff] 0.0
        %553 = vst [vmem:[#allocation2 + $0x188] sm:$0xff] 0.0
        %554 = vst [vmem:[#allocation2 + $0x190] sm:$0x3] 0.0
        %555 = vst [vmem:[#allocation2 + $0x198] sm:$0xff] 0.0
        %556 = vst [vmem:[#allocation2 + $0x1a0] sm:$0xff] 0.0
        %557 = vst [vmem:[#allocation2 + $0x1a8] sm:$0x3] 0.0
        %558 = vst [vmem:[#allocation3] sm:$0xff] 0.0
        %559 = vst [vmem:[#allocation3 + $0x8] sm:$0x3] 0.0
        %560 = vst [vmem:[#allocation3 + $0x10] sm:$0xff] 0.0
        %561 = vst [vmem:[#allocation3 + $0x18] sm:$0x3] 0.0
        %562 = vst [vmem:[#allocation3 + $0x20] sm:$0xff] 0.0
        %563 = vst [vmem:[#allocation3 + $0x28] sm:$0x3] 0.0
        %564 = vst [vmem:[#allocation3 + $0x30] sm:$0xff] 0.0
        %565 = vst [vmem:[#allocation3 + $0x38] sm:$0x3] 0.0
        %566 = vst [vmem:[#allocation3 + $0x40] sm:$0xff] 0.0
        %567 = vst [vmem:[#allocation3 + $0x48] sm:$0x3] 0.0
        %568 = vst [vmem:[#allocation3 + $0x50] sm:$0xff] 0.0
        %569 = vst [vmem:[#allocation3 + $0x58] sm:$0x3] 0.0
        %570 = vst [vmem:[#allocation3 + $0x60] sm:$0xff] 0.0
        %571 = vst [vmem:[#allocation3 + $0x68] sm:$0x3] 0.0
        %572 = vst [vmem:[#allocation3 + $0x70] sm:$0xff] 0.0
        %573 = vst [vmem:[#allocation3 + $0x78] sm:$0x3] 0.0
        %574 = vst [vmem:[#allocation3 + $0x80] sm:$0xff] 0.0
        %575 = vst [vmem:[#allocation3 + $0x88] sm:$0x3] 0.0
        %576 = vst [vmem:[#allocation3 + $0x90] sm:$0xff] 0.0
        %577 = vst [vmem:[#allocation3 + $0x98] sm:$0x3] 0.0
        %578 = vst [vmem:[#allocation2] sm:$0xff] %v472
        %579 = vst [vmem:[#allocation2 + $0x8] sm:$0xff] %v473
        %580 = vst [vmem:[#allocation2 + $0x18] sm:$0xff] %v474
        %581 = vst [vmem:[#allocation2 + $0x20] sm:$0xff] %v475
        %582 = vst [vmem:[#allocation2 + $0x30] sm:$0xff] %v476
        %583 = vst [vmem:[#allocation2 + $0x38] sm:$0xff] %v477
        %584 = vst [vmem:[#allocation2 + $0x48] sm:$0xff] %v478
        %585 = vst [vmem:[#allocation2 + $0x50] sm:$0xff] %v479
        %586 = vst [vmem:[#allocation2 + $0x60] sm:$0xff] %v480
        %587 = vst [vmem:[#allocation2 + $0x68] sm:$0xff] %v481
        %588 = vst [vmem:[#allocation2 + $0x78] sm:$0xff] %v482
        %589 = vst [vmem:[#allocation2 + $0x80] sm:$0xff] %v483
        %590 = vst [vmem:[#allocation2 + $0x90] sm:$0xff] %v484
        %591 = vst [vmem:[#allocation2 + $0x98] sm:$0xff] %v485
        %592 = vst [vmem:[#allocation2 + $0xa8] sm:$0xff] %v486
        %593 = vst [vmem:[#allocation2 + $0xb0] sm:$0xff] %v487
        %594 = vst [vmem:[#allocation2 + $0xc0] sm:$0xff] %v488
        %595 = vst [vmem:[#allocation2 + $0xc8] sm:$0xff] %v489
        %596 = vst [vmem:[#allocation2 + $0xd8] sm:$0xff] %v490
        %597 = vst [vmem:[#allocation2 + $0xe0] sm:$0xff] %v491
        %598 = vst [vmem:[#allocation2 + $0xf0] sm:$0xff] %v492
        %599 = vst [vmem:[#allocation2 + $0xf8] sm:$0xff] %v493
        %600 = vst [vmem:[#allocation2 + $0x108] sm:$0xff] %v494
        %601 = vst [vmem:[#allocation2 + $0x110] sm:$0xff] %v495
        %602 = vst [vmem:[#allocation2 + $0x120] sm:$0xff] %v496
        %603 = vst [vmem:[#allocation2 + $0x128] sm:$0xff] %v497
        %604 = vst [vmem:[#allocation2 + $0x138] sm:$0xff] %v498
        %605 = vst [vmem:[#allocation2 + $0x140] sm:$0xff] %v499
        %606 = vst [vmem:[#allocation2 + $0x150] sm:$0xff] %v500
        %607 = vst [vmem:[#allocation2 + $0x158] sm:$0xff] %v501
        %608 = vst [vmem:[#allocation2 + $0x168] sm:$0xff] %v502
        %609 = vst [vmem:[#allocation2 + $0x170] sm:$0xff] %v503
        %v610 = vld [vmem:[#allocation2] ss:$2 sm:$0xff]
        %s611 = scalar_lea.vmem [#allocation2], 24
        %v612 = vld [vmem:[%s611] ss:$2 sm:$0xff]
        %s613 = scalar_lea.vmem [#allocation2], 48
        %v614 = vld [vmem:[%s613] ss:$2 sm:$0xff]
        %s615 = scalar_lea.vmem [#allocation2], 72
        %v616 = vld [vmem:[%s615] ss:$2 sm:$0xff]
        %s617 = scalar_lea.vmem [#allocation2], 96
        %v618 = vld [vmem:[%s617] ss:$2 sm:$0xff]
        %s619 = scalar_lea.vmem [#allocation2], 120
        %v620 = vld [vmem:[%s619] ss:$2 sm:$0xff]
        %s621 = scalar_lea.vmem [#allocation2], 144
        %v622 = vld [vmem:[%s621] ss:$2 sm:$0xff]
        %s623 = scalar_lea.vmem [#allocation2], 168
        %v624 = vld [vmem:[%s623] ss:$2 sm:$0xff]
        %s625 = scalar_lea.vmem [#allocation2], 192
        %v626 = vld [vmem:[%s625] ss:$2 sm:$0xff]
        %s627 = scalar_lea.vmem [#allocation2], 216
        %v628 = vld [vmem:[%s627] ss:$2 sm:$0xff]
        %s629 = scalar_lea.vmem [#allocation2], 240
        %v630 = vld [vmem:[%s629] ss:$2 sm:$0xff]
        %s631 = scalar_lea.vmem [#allocation2], 264
        %v632 = vld [vmem:[%s631] ss:$2 sm:$0xff]
        %s633 = scalar_lea.vmem [#allocation2], 288
        %v634 = vld [vmem:[%s633] ss:$2 sm:$0xff]
        %s635 = scalar_lea.vmem [#allocation2], 312
        %v636 = vld [vmem:[%s635] ss:$2 sm:$0xff]
        %s637 = scalar_lea.vmem [#allocation2], 336
        %v638 = vld [vmem:[%s637] ss:$2 sm:$0xff]
        %s639 = scalar_lea.vmem [#allocation2], 360
        %v640 = vld [vmem:[%s639] ss:$2 sm:$0xff]
        %s641 = scalar_lea.vmem [#allocation2], 384
        %v642 = vld [vmem:[%s641] ss:$2 sm:$0xff]
        %s643 = scalar_lea.vmem [#allocation2], 1
        %v644 = vld [vmem:[%s643] ss:$2 sm:$0xff]
        %s645 = scalar_lea.vmem [#allocation2], 25
        %v646 = vld [vmem:[%s645] ss:$2 sm:$0xff]
        %s647 = scalar_lea.vmem [#allocation2], 49
        %v648 = vld [vmem:[%s647] ss:$2 sm:$0xff]
        %s649 = scalar_lea.vmem [#allocation2], 73
        %v650 = vld [vmem:[%s649] ss:$2 sm:$0xff]
        %s651 = scalar_lea.vmem [#allocation2], 97
        %v652 = vld [vmem:[%s651] ss:$2 sm:$0xff]
        %s653 = scalar_lea.vmem [#allocation2], 121
        %v654 = vld [vmem:[%s653] ss:$2 sm:$0xff]
        %s655 = scalar_lea.vmem [#allocation2], 145
        %v656 = vld [vmem:[%s655] ss:$2 sm:$0xff]
        %s657 = scalar_lea.vmem [#allocation2], 169
        %v658 = vld [vmem:[%s657] ss:$2 sm:$0xff]
        %s659 = scalar_lea.vmem [#allocation2], 193
        %v660 = vld [vmem:[%s659] ss:$2 sm:$0xff]
        %s661 = scalar_lea.vmem [#allocation2], 217
        %v662 = vld [vmem:[%s661] ss:$2 sm:$0xff]
        %s663 = scalar_lea.vmem [#allocation2], 241
        %v664 = vld [vmem:[%s663] ss:$2 sm:$0xff]
        %s665 = scalar_lea.vmem [#allocation2], 265
        %v666 = vld [vmem:[%s665] ss:$2 sm:$0xff]
        %s667 = scalar_lea.vmem [#allocation2], 289
        %v668 = vld [vmem:[%s667] ss:$2 sm:$0xff]
        %s669 = scalar_lea.vmem [#allocation2], 313
        %v670 = vld [vmem:[%s669] ss:$2 sm:$0xff]
        %s671 = scalar_lea.vmem [#allocation2], 337
        %v672 = vld [vmem:[%s671] ss:$2 sm:$0xff]
        %s673 = scalar_lea.vmem [#allocation2], 361
        %v674 = vld [vmem:[%s673] ss:$2 sm:$0xff]
        %s675 = scalar_lea.vmem [#allocation2], 385
        %v676 = vld [vmem:[%s675] ss:$2 sm:$0xff]
        %s677 = scalar_lea.vmem [#allocation2], 2
        %v678 = vld [vmem:[%s677] ss:$2 sm:$0xff]
        %s679 = scalar_lea.vmem [#allocation2], 26
        %v680 = vld [vmem:[%s679] ss:$2 sm:$0xff]
        %s681 = scalar_lea.vmem [#allocation2], 50
        %v682 = vld [vmem:[%s681] ss:$2 sm:$0xff]
        %s683 = scalar_lea.vmem [#allocation2], 74
        %v684 = vld [vmem:[%s683] ss:$2 sm:$0xff]
        %s685 = scalar_lea.vmem [#allocation2], 98
        %v686 = vld [vmem:[%s685] ss:$2 sm:$0xff]
        %s687 = scalar_lea.vmem [#allocation2], 122
        %v688 = vld [vmem:[%s687] ss:$2 sm:$0xff]
        %s689 = scalar_lea.vmem [#allocation2], 146
        %v690 = vld [vmem:[%s689] ss:$2 sm:$0xff]
        %s691 = scalar_lea.vmem [#allocation2], 170
        %v692 = vld [vmem:[%s691] ss:$2 sm:$0xff]
        %s693 = scalar_lea.vmem [#allocation2], 194
        %v694 = vld [vmem:[%s693] ss:$2 sm:$0xff]
        %s695 = scalar_lea.vmem [#allocation2], 218
        %v696 = vld [vmem:[%s695] ss:$2 sm:$0xff]
        %s697 = scalar_lea.vmem [#allocation2], 242
        %v698 = vld [vmem:[%s697] ss:$2 sm:$0xff]
        %s699 = scalar_lea.vmem [#allocation2], 266
        %v700 = vld [vmem:[%s699] ss:$2 sm:$0xff]
        %s701 = scalar_lea.vmem [#allocation2], 290
        %v702 = vld [vmem:[%s701] ss:$2 sm:$0xff]
        %s703 = scalar_lea.vmem [#allocation2], 314
        %v704 = vld [vmem:[%s703] ss:$2 sm:$0xff]
        %s705 = scalar_lea.vmem [#allocation2], 338
        %v706 = vld [vmem:[%s705] ss:$2 sm:$0xff]
        %s707 = scalar_lea.vmem [#allocation2], 362
        %v708 = vld [vmem:[%s707] ss:$2 sm:$0xff]
        %s709 = scalar_lea.vmem [#allocation2], 386
        %v710 = vld [vmem:[%s709] ss:$2 sm:$0xff]
        %v711 = vmax.f32 %v610, %v644
        %v712 = vmax.f32 %v612, %v646
        %v713 = vmax.f32 %v614, %v648
        %v714 = vmax.f32 %v616, %v650
        %v715 = vmax.f32 %v618, %v652
        %v716 = vmax.f32 %v620, %v654
        %v717 = vmax.f32 %v622, %v656
        %v718 = vmax.f32 %v624, %v658
        %v719 = vmax.f32 %v626, %v660
        %v720 = vmax.f32 %v628, %v662
        %v721 = vmax.f32 %v630, %v664
        %v722 = vmax.f32 %v632, %v666
        %v723 = vmax.f32 %v634, %v668
        %v724 = vmax.f32 %v636, %v670
        %v725 = vmax.f32 %v638, %v672
        %v726 = vmax.f32 %v640, %v674
        %v727 = vmax.f32 %v642, %v676
        %v728 = vmax.f32 %v711, %v678
        %v729 = vmax.f32 %v712, %v680
        %v730 = vmax.f32 %v713, %v682
        %v731 = vmax.f32 %v714, %v684
        %v732 = vmax.f32 %v715, %v686
        %v733 = vmax.f32 %v716, %v688
        %v734 = vmax.f32 %v717, %v690
        %v735 = vmax.f32 %v718, %v692
        %v736 = vmax.f32 %v719, %v694
        %v737 = vmax.f32 %v720, %v696
        %v738 = vmax.f32 %v721, %v698
        %v739 = vmax.f32 %v722, %v700
        %v740 = vmax.f32 %v723, %v702
        %v741 = vmax.f32 %v724, %v704
        %v742 = vmax.f32 %v725, %v706
        %v743 = vmax.f32 %v726, %v708
        %v744 = vmax.f32 %v727, %v710
        %v745 = vmax.f32 %v728, %v729
        %v746 = vmax.f32 %v730, %v731
        %v747 = vmax.f32 %v732, %v733
        %v748 = vmax.f32 %v734, %v735
        %v749 = vmax.f32 %v736, %v737
        %v750 = vmax.f32 %v738, %v739
        %v751 = vmax.f32 %v740, %v741
        %v752 = vmax.f32 %v742, %v743
        %v753 = vmax.f32 %v745, %v730
        %v754 = vmax.f32 %v746, %v732
        %v755 = vmax.f32 %v747, %v734
        %v756 = vmax.f32 %v748, %v736
        %v757 = vmax.f32 %v749, %v738
        %v758 = vmax.f32 %v750, %v740
        %v759 = vmax.f32 %v751, %v742
        %v760 = vmax.f32 %v752, %v744
        %761 = vst [vmem:[%s194] sm:$0xff] %v753
        %762 = vst [vmem:[%s194 + $0x8] sm:$0xff] %v754
        %763 = vst [vmem:[%s194 + $0x10] sm:$0xff] %v755
        %764 = vst [vmem:[%s194 + $0x18] sm:$0xff] %v756
        %765 = vst [vmem:[%s194 + $0x20] sm:$0xff] %v757
        %766 = vst [vmem:[%s194 + $0x28] sm:$0xff] %v758
        %767 = vst [vmem:[%s194 + $0x30] sm:$0xff] %v759
        %768 = vst [vmem:[%s194 + $0x38] sm:$0xff] %v760
        %769 = vst [vmem:[#allocation3] sm:$0xff] %v753
        %770 = vst [vmem:[#allocation3 + $0x10] sm:$0xff] %v754
        %771 = vst [vmem:[#allocation3 + $0x20] sm:$0xff] %v755
        %772 = vst [vmem:[#allocation3 + $0x30] sm:$0xff] %v756
        %773 = vst [vmem:[#allocation3 + $0x40] sm:$0xff] %v757
        %774 = vst [vmem:[#allocation3 + $0x50] sm:$0xff] %v758
        %775 = vst [vmem:[#allocation3 + $0x60] sm:$0xff] %v759
        %776 = vst [vmem:[#allocation3 + $0x70] sm:$0xff] %v760
        %v777 = vld [vmem:[#allocation3] ss:$2 sm:$0xf]
        %s778 = scalar_lea.vmem [#allocation3], 16
        %v779 = vld [vmem:[%s778] ss:$2 sm:$0xf]
        %s780 = scalar_lea.vmem [#allocation3], 32
        %v781 = vld [vmem:[%s780] ss:$2 sm:$0xf]
        %s782 = scalar_lea.vmem [#allocation3], 48
        %v783 = vld [vmem:[%s782] ss:$2 sm:$0xf]
        %s784 = scalar_lea.vmem [#allocation3], 64
        %v785 = vld [vmem:[%s784] ss:$2 sm:$0xf]
        %s786 = scalar_lea.vmem [#allocation3], 80
        %v787 = vld [vmem:[%s786] ss:$2 sm:$0xf]
        %s788 = scalar_lea.vmem [#allocation3], 96
        %v789 = vld [vmem:[%s788] ss:$2 sm:$0xf]
        %s790 = scalar_lea.vmem [#allocation3], 112
        %v791 = vld [vmem:[%s790] ss:$2 sm:$0xf]
        %s792 = scalar_lea.vmem [#allocation3], 128
        %v793 = vld [vmem:[%s792] ss:$2 sm:$0xf]
        %s794 = scalar_lea.vmem [#allocation3], 1
        %v795 = vld [vmem:[%s794] ss:$2 sm:$0xf]
        %s796 = scalar_lea.vmem [#allocation3], 17
        %v797 = vld [vmem:[%s796] ss:$2 sm:$0xf]
        %s798 = scalar_lea.vmem [#allocation3], 33
        %v799 = vld [vmem:[%s798] ss:$2 sm:$0xf]
        %s800 = scalar_lea.vmem [#allocation3], 49
        %v801 = vld [vmem:[%s800] ss:$2 sm:$0xf]
        %s802 = scalar_lea.vmem [#allocation3], 65
        %v803 = vld [vmem:[%s802] ss:$2 sm:$0xf]
        %s804 = scalar_lea.vmem [#allocation3], 81
        %v805 = vld [vmem:[%s804] ss:$2 sm:$0xf]
        %s806 = scalar_lea.vmem [#allocation3], 97
        %v807 = vld [vmem:[%s806] ss:$2 sm:$0xf]
        %s808 = scalar_lea.vmem [#allocation3], 113
        %v809 = vld [vmem:[%s808] ss:$2 sm:$0xf]
        %s810 = scalar_lea.vmem [#allocation3], 129
        %v811 = vld [vmem:[%s810] ss:$2 sm:$0xf]
        %s812 = scalar_lea.vmem [#allocation3], 2
        %v813 = vld [vmem:[%s812] ss:$2 sm:$0xf]
        %s814 = scalar_lea.vmem [#allocation3], 18
        %v815 = vld [vmem:[%s814] ss:$2 sm:$0xf]
        %s816 = scalar_lea.vmem [#allocation3], 34
        %v817 = vld [vmem:[%s816] ss:$2 sm:$0xf]
        %s818 = scalar_lea.vmem [#allocation3], 50
        %v819 = vld [vmem:[%s818] ss:$2 sm:$0xf]
        %s820 = scalar_lea.vmem [#allocation3], 66
        %v821 = vld [vmem:[%s820] ss:$2 sm:$0xf]
        %s822 = scalar_lea.vmem [#allocation3], 82
        %v823 = vld [vmem:[%s822] ss:$2 sm:$0xf]
        %s824 = scalar_lea.vmem [#allocation3], 98
        %v825 = vld [vmem:[%s824] ss:$2 sm:$0xf]
        %s826 = scalar_lea.vmem [#allocation3], 114
        %v827 = vld [vmem:[%s826] ss:$2 sm:$0xf]
        %s828 = scalar_lea.vmem [#allocation3], 130
        %v829 = vld [vmem:[%s828] ss:$2 sm:$0xf]
        %v830 = vmax.f32 %v777, %v795
        %v831 = vmax.f32 %v779, %v797
        %v832 = vmax.f32 %v781, %v799
        %v833 = vmax.f32 %v783, %v801
        %v834 = vmax.f32 %v785, %v803
        %v835 = vmax.f32 %v787, %v805
        %v836 = vmax.f32 %v789, %v807
        %v837 = vmax.f32 %v791, %v809
        %v838 = vmax.f32 %v793, %v811
        %v839 = vmax.f32 %v830, %v813
        %v840 = vmax.f32 %v831, %v815
        %v841 = vmax.f32 %v832, %v817
        %v842 = vmax.f32 %v833, %v819
        %v843 = vmax.f32 %v834, %v821
        %v844 = vmax.f32 %v835, %v823
        %v845 = vmax.f32 %v836, %v825
        %v846 = vmax.f32 %v837, %v827
        %v847 = vmax.f32 %v838, %v829
        %v848 = vmax.f32 %v839, %v840
        %v849 = vmax.f32 %v841, %v842
        %v850 = vmax.f32 %v843, %v844
        %v851 = vmax.f32 %v845, %v846
        %v852 = vmax.f32 %v848, %v841
        %v853 = vmax.f32 %v849, %v843
        %v854 = vmax.f32 %v850, %v845
        %v855 = vmax.f32 %v851, %v847
        %856 = vst [vmem:[%s201] sm:$0xf] %v852
        %857 = vst [vmem:[%s201 + $0x4] sm:$0xf] %v853
        %858 = vst [vmem:[%s201 + $0x8] sm:$0xf] %v854
        %859 = vst [vmem:[%s201 + $0xc] sm:$0xf] %v855
        %s860 = sand.u32 %s98, 1
        %s861 = scalar_lea.sflag [#allocation5], %s860
        %s862 = sand.u32 %s98, 1
        %s863 = smul.addr %s862, 64
        %s864 = scalar_lea.vmem [#allocation4], %s863
        %s865 = sand.u32 %s124, 1
        %s866 = scalar_lea.sflag [#allocation7], %s865
        %s867 = sand.u32 %s124, 1
        %s868 = smul.addr %s867, 16
        %s869 = scalar_lea.vmem [#allocation6], %s868
        // Predicated region
        $region33: #{tpu_custom_call.1} parent=31 // pred_check
          %p870 = pneg %p108
        $region34: #{tpu_custom_call.1} parent=31 // pred_check_branch
          %872 = sbr.rel (%p870) target = $region36
        $region35: #{tpu_custom_call.1} parent=31 // pred_region
          %874 = vsyncadd %s861, 0
          %s875 = smul.addr %s22, 8
          %s876 = smul.addr %s875, 8
          %s877 = scalar_lea.hbm %s3, %s876
          %s878 = sshll.u32 %s864, 4
          %s879 = int_to_ptr.vmem [resolvable:$true] %s878
          %s880 = sshll.u32 %s877, 4
          %s881 = int_to_ptr.hbm [resolvable:$true] %s880
          %886 = dma.vmem_to_hbm [thread:$0]  %s879, 1024, %s881, %s861, 128, 128, 8
        $region36: #{tpu_custom_call.1} parent=31 // pred_fallthru
          _
        // Predicated region
        $region37: #{tpu_custom_call.1} parent=31 // pred_check
          %p887 = pneg %p134
        $region38: #{tpu_custom_call.1} parent=31 // pred_check_branch
          %889 = sbr.rel (%p887) target = $region40
        $region39: #{tpu_custom_call.1} parent=31 // pred_region
          %891 = vsyncadd %s866, 0
          %s892 = smul.addr %s22, 4
          %s893 = smul.addr %s892, 4
          %s894 = scalar_lea.hbm %s4, %s893
          %s895 = sshll.u32 %s869, 4
          %s896 = int_to_ptr.vmem [resolvable:$true] %s895
          %s897 = sshll.u32 %s894, 4
          %s898 = int_to_ptr.hbm [resolvable:$true] %s897
          %903 = dma.vmem_to_hbm [thread:$0]  %s896, 256, %s898, %s866, 64, 64, 4
        $region40: #{tpu_custom_call.1} parent=31 // pred_fallthru
          _
      $region32: #{tpu_custom_call.1} parent=5 // pred_fallthru
        _
      %p904 = scmp.le.s32.totalorder 2, %s17
      // Predicated region
      $region41: #{tpu_custom_call.1} parent=5 // pred_check
        %p905 = pneg %p904
      $region42: #{tpu_custom_call.1} parent=5 // pred_check_branch
        %907 = sbr.rel (%p905) target = $region44
      $region43: #{tpu_custom_call.1} parent=5 // pred_region
        %s908 = ssub.s32 %s17, 2
        // Predicated region
        $region45: #{tpu_custom_call.1} parent=43 // pred_check
          %p909 = pneg %p114
        $region46: #{tpu_custom_call.1} parent=43 // pred_check_branch
          %911 = sbr.rel (%p909) target = $region48
        $region47: #{tpu_custom_call.1} parent=43 // pred_region
          %s912 = sand.u32 %s99, 1
          %s913 = scalar_lea.sflag [#allocation5], %s912
          %s914 = sand.u32 %s99, 1
          %s915 = smul.addr %s914, 64
          %s916 = scalar_lea.vmem [#allocation4], %s915
          %918 = dma.done %s913, 1024
        $region48: #{tpu_custom_call.1} parent=43 // pred_fallthru
          _
        // Predicated region
        $region49: #{tpu_custom_call.1} parent=43 // pred_check
          %p919 = pneg %p140
        $region50: #{tpu_custom_call.1} parent=43 // pred_check_branch
          %921 = sbr.rel (%p919) target = $region52
        $region51: #{tpu_custom_call.1} parent=43 // pred_region
          %s922 = sand.u32 %s125, 1
          %s923 = scalar_lea.sflag [#allocation7], %s922
          %s924 = sand.u32 %s125, 1
          %s925 = smul.addr %s924, 16
          %s926 = scalar_lea.vmem [#allocation6], %s925
          %928 = dma.done %s923, 256
        $region52: #{tpu_custom_call.1} parent=43 // pred_fallthru
          _
      $region44: #{tpu_custom_call.1} parent=5 // pred_fallthru
        _
    $region6: #{tpu_custom_call.1} parent=1 // loop_footer
      %s21 = sadd.s32 1, %s17
    $region7: #{tpu_custom_call.1} parent=1 // loop_footer_branch
      %16 = sbr.rel target = $region3
    $region8: #{tpu_custom_call.1} parent=1 // loop_exit
      _
    %929 = vsyncpa [#allocation5], 1
    %s930 = scalar_lea.sflag [#allocation5], 1
    %931 = vsyncpa %s930, 1
    %932 = vsyncpa [#allocation7], 1
    %s933 = scalar_lea.sflag [#allocation7], 1
    %934 = vsyncpa %s933, 1

</llo_original>
